<compile_context>
chip_gen: v6e
topology: v6e:2x2x1
jax: 0.10.0
libtpu: 0.0.40
codegen_flags: <defaults>
</compile_context>

<pallas_src>
import numpy as np
import jax
import jax.numpy as jnp
from jax.experimental import pallas as pl
from jax.experimental.pallas import tpu as pltpu


# ----------------------------------------------------------------------------
# Host-side construction of the composite (blur o bicubic-down2) matrices.
# ----------------------------------------------------------------------------
def _blur_matrix(size: int) -> np.ndarray:
    """1-D [1,2,1]/4 blur with replication padding, as a (size, size) matrix."""
    m = np.zeros((size, size), dtype=np.float64)
    for i in range(size):
        for off, w in ((-1, 0.25), (0, 0.5), (1, 0.25)):
            j = min(max(i + off, 0), size - 1)
            m[i, j] += w
    return m


def _bicubic_down2_matrix(size: int) -> np.ndarray:
    """Factor-2 bicubic decimation (align_corners=False, a=-0.75), (size//2, size)."""
    # src = (i + 0.5) * 2 - 0.5 = 2i + 0.5  ->  fraction t = 0.5 always.
    weights = (-0.09375, 0.59375, 0.59375, -0.09375)   # Keys cubic, a=-0.75, t=0.5
    offsets = (-1, 0, 1, 2)
    m = np.zeros((size // 2, size), dtype=np.float64)
    for i in range(size // 2):
        base = 2 * i
        for off, w in zip(offsets, weights):
            j = min(max(base + off, 0), size - 1)      # PyTorch clamps source indices
            m[i, j] += w
    return m


# ----------------------------------------------------------------------------
# Pallas kernel: per block of TN planes, two batched MXU matmuls.
# ----------------------------------------------------------------------------
def _downsample_kernel(a_ref, ct_ref, x_ref, o_ref):
    tn, h, w = x_ref.shape          # static block shape
    h2 = a_ref.shape[0]
    w2 = ct_ref.shape[1]

    x = x_ref[...].astype(jnp.float32)                        # (TN, H, W)

    # (1) W-side contraction: one flat dot, M = TN*H keeps the MXU rows full.
    y = jnp.dot(x.reshape(tn * h, w), ct_ref[...],
                preferred_element_type=jnp.float32)            # (TN*H, W2)

    # (2) Lane-concatenate the planes: (TN, H, W2) -> (H, TN*W2).  Done on the
    #     half-width intermediate (cheapest place for the relayout).
    if tn > 1:
        y = y.reshape(tn, h, w2).transpose(1, 0, 2).reshape(h, tn * w2)

    # (3) H-side contraction: one dot with N = TN*W2 lanes -> lane-dense output slab.
    z = jnp.dot(a_ref[...], y, preferred_element_type=jnp.float32)   # (H2, TN*W2)

    o_ref[0] = z.astype(o_ref.dtype)


# ----------------------------------------------------------------------------
# Block-size / grid selection.
# ----------------------------------------------------------------------------
_VMEM_LIMIT_BYTES = 48 * 1024 * 1024     # safe on v7x (64 MiB physical VMEM), ample on v5e/v6e
_TOTAL_BLOCK_BUDGET = 36 * 1024 * 1024   # leave headroom under the scoped limit


def _pick_planes_per_block(n_planes: int, h: int, w: int,
                           itemsize: int, budget_bytes: int) -> int:
    """Largest divisor of n_planes whose pipelined footprint fits the VMEM budget,
    preferring a grid of >= 2 (ideally even) steps so v7x can use both TensorCores."""
    h2, w2 = h // 2, w // 2
    per_plane = (2 * h * w * itemsize        # input block, double-buffered
                 + 2 * h2 * w2 * itemsize    # output block, double-buffered
                 + 3 * h * w * 4)            # f32 in-kernel temporaries (cast / y / relayout)
    cap = max(1, budget_bytes // max(per_plane, 1))
    divisors = [t for t in range(1, n_planes + 1)
                if n_planes % t == 0 and t <= cap] or [1]

    def best(pred):
        cands = [t for t in divisors if pred(n_planes // t)]
        return max(cands) if cands else None

    return (best(lambda g: g >= 2 and g % 2 == 0)   # even grid, both TCs busy
            or best(lambda g: g >= 2)               # at least 2 steps
            or max(divisors))                       # fall back to biggest block


# ----------------------------------------------------------------------------
# Public forward.
# ----------------------------------------------------------------------------
def downsample_forward(x: jax.Array) -> jax.Array:
    """Equivalent of DownSample.forward(): replication-pad blur + x2 bicubic downsample."""
    b, c, h, w = x.shape
    assert h % 2 == 0 and w % 2 == 0, "DownSample expects even spatial dims"
    h2, w2 = h // 2, w // 2

    # Composite operators (float64 on host, cast to f32).
    a_mat = jnp.asarray((_bicubic_down2_matrix(h) @ _blur_matrix(h)).astype(np.float32))    # (H2, H)
    ct_mat = jnp.asarray((_bicubic_down2_matrix(w) @ _blur_matrix(w)).T.astype(np.float32))  # (W, W2)

    n_planes = b * c
    xf = x.reshape(n_planes, h, w)

    itemsize = int(np.dtype(x.dtype).itemsize)
    fixed_bytes = 2 * 4 * (h2 * h + w * w2)          # A / Ct (double-buffered, f32)
    budget = max(_TOTAL_BLOCK_BUDGET - fixed_bytes, 1 << 20)
    tn = _pick_planes_per_block(n_planes, h, w, itemsize, budget)
    num_blocks = n_planes // tn
    grid = (num_blocks,)

    out_packed = pl.pallas_call(
        _downsample_kernel,
        out_shape=jax.ShapeDtypeStruct((num_blocks, h2, tn * w2), x.dtype),
        grid=grid,
        in_specs=[
            pl.BlockSpec((h2, h), lambda i: (0, 0)),        # A: VMEM-resident
            pl.BlockSpec((w, w2), lambda i: (0, 0)),        # Ct: VMEM-resident
            pl.BlockSpec((tn, h, w), lambda i: (i, 0, 0)),  # x planes: pipelined
        ],
        out_specs=pl.BlockSpec((1, h2, tn * w2), lambda i: (i, 0, 0)),  # lane-dense slab
        compiler_params=pltpu.CompilerParams(
            dimension_semantics=("parallel",),              # independent plane blocks
            vmem_limit_bytes=_VMEM_LIMIT_BYTES,
        ),
    )(a_mat, ct_mat, xf)

    # Un-pack the lane-concatenated slab: (G, H2, TN*W2) -> (B, C, H2, W2).
    out = out_packed.reshape(num_blocks, h2, tn, w2).transpose(0, 2, 1, 3)
    return out.reshape(b, c, h2, w2)


# ----------------------------------------------------------------------------
# Pure-JAX reference (direct blur + bicubic, no matrix composition) for checking.
# ----------------------------------------------------------------------------
def reference_downsample(x: jax.Array) -> jax.Array:
    bsz, ch, h, w = x.shape
    xp = jnp.pad(x, ((0, 0), (0, 0), (1, 1), (1, 1)), mode="edge")
    k = jnp.array([[1.0, 2.0, 1.0], [2.0, 4.0, 2.0], [1.0, 2.0, 1.0]], jnp.float32) / 16.0
    sm = jnp.zeros_like(x)
    for di in range(3):
        for dj in range(3):
            sm = sm + k[di, dj] * xp[:, :, di:di + h, dj:dj + w]

    wts = jnp.array([-0.09375, 0.59375, 0.59375, -0.09375], jnp.float32)

    def down_axis(arr, axis):
        size = arr.shape[axis]
        base = 2 * jnp.arange(size // 2)
        acc = None
        for t in range(4):
            idx = jnp.clip(base + (t - 1), 0, size - 1)
            piece = wts[t] * jnp.take(arr, idx, axis=axis)
            acc = piece if acc is None else acc + piece
        return acc

    y = down_axis(sm, 2)
    y = down_axis(y, 3)
    return y


if __name__ == "__main__":
    key = jax.random.PRNGKey(0)
    x = jax.random.normal(key, (2, 4, 16, 16), dtype=jnp.float32)

    out = downsample_forward(x)
    out = jax.block_until_ready(out)

    ref = reference_downsample(x)
    assert out.shape == (2, 4, 8, 8), out.shape
    assert out.dtype == jnp.float32
    # Default MXU precision (per perf review) admits ~1e-3 bf16-level error vs the
    # pure-f32 reference; 1e-2 still catches any factorization / layout bug (O(0.1-1)).
    max_err = float(jnp.max(jnp.abs(out - ref)))
    assert jnp.allclose(out, ref, atol=1e-2, rtol=1e-2), f"max abs err = {max_err}"

    print("KERNEL_OK")
</pallas_src>

<mosaic_0001>
module attributes {stable_mosaic.version = 11 : i64} {
  func.func @_downsample_kernel(%arg0: i32, %arg1: memref<8x16xf32, #tpu.memory_space<vmem>>, %arg2: memref<16x8xf32, #tpu.memory_space<vmem>>, %arg3: memref<4x16x16xf32, #tpu.memory_space<vmem>>, %arg4: memref<1x8x32xf32, #tpu.memory_space<vmem>>) attributes {dimension_semantics = [#tpu.dimension_semantics<parallel>], iteration_bounds = array<i64: 2>, scalar_prefetch = 0 : i64, scratch_operands = 0 : i64, tpu.core_type = #tpu.core_type<tc>, window_params = [{pipeline_mode = #tpu.pipeline_mode<synchronous>, transform_indices = @transform_0, window_bounds = array<i64: 8, 16>}, {pipeline_mode = #tpu.pipeline_mode<synchronous>, transform_indices = @transform_1, window_bounds = array<i64: 16, 8>}, {transform_indices = @transform_2, window_bounds = array<i64: 4, 16, 16>}, {transform_indices = @transform_3, window_bounds = array<i64: 1, 8, 32>}]} {
    %c0 = arith.constant 0 : index
    %c0_0 = arith.constant 0 : index
    %c0_1 = arith.constant 0 : index
    %0 = vector.load %arg3[%c0, %c0_0, %c0_1] : memref<4x16x16xf32, #tpu.memory_space<vmem>>, vector<4x16x16xf32>
    %1 = vector.shape_cast %0 : vector<4x16x16xf32> to vector<64x16xf32>
    %c0_2 = arith.constant 0 : index
    %c0_3 = arith.constant 0 : index
    %2 = vector.load %arg2[%c0_2, %c0_3] : memref<16x8xf32, #tpu.memory_space<vmem>>, vector<16x8xf32>
    %cst = arith.constant dense<0.000000e+00> : vector<64x8xf32>
    %3 = tpu.matmul %1, %2, %cst {dimension_numbers = #tpu.dot_dimension_numbers<[1], [0], [0], [1], [0, 0, 1, 1], [], []>} : vector<64x16xf32>, vector<16x8xf32>, vector<64x8xf32> -> vector<64x8xf32>
    %4 = vector.shape_cast %3 : vector<64x8xf32> to vector<4x16x8xf32>
    %5 = tpu.transpose %4, [1, 0, 2] : vector<4x16x8xf32> -> vector<16x4x8xf32>
    %6 = vector.shape_cast %5 : vector<16x4x8xf32> to vector<16x32xf32>
    %c0_4 = arith.constant 0 : index
    %c0_5 = arith.constant 0 : index
    %7 = vector.load %arg1[%c0_4, %c0_5] : memref<8x16xf32, #tpu.memory_space<vmem>>, vector<8x16xf32>
    %cst_6 = arith.constant dense<0.000000e+00> : vector<8x32xf32>
    %8 = tpu.matmul %7, %6, %cst_6 {dimension_numbers = #tpu.dot_dimension_numbers<[1], [0], [0], [1], [0, 0, 1, 1], [], []>} : vector<8x16xf32>, vector<16x32xf32>, vector<8x32xf32> -> vector<8x32xf32>
    %c0_7 = arith.constant 0 : index
    %c0_8 = arith.constant 0 : index
    %c0_9 = arith.constant 0 : index
    %9 = vector.load %arg4[%c0_7, %c0_8, %c0_9] : memref<1x8x32xf32, #tpu.memory_space<vmem>>, vector<1x8x32xf32>
    %10 = vector.shape_cast %9 : vector<1x8x32xf32> to vector<8x32xf32>
    %11 = vector.shape_cast %8 : vector<8x32xf32> to vector<1x8x32xf32>
    tpu.vector_store %arg4[%c0_7, %c0_8, %c0_9], %11 {strides = array<i32>} : memref<1x8x32xf32, #tpu.memory_space<vmem>>, vector<1x8x32xf32>,
    return
  }
  func.func @transform_0(%arg0: i32) -> (i32, i32) {
    %c0_i32 = arith.constant 0 : i32
    %c0_i32_0 = arith.constant 0 : i32
    %c0_i32_1 = arith.constant 0 : i32
    return %c0_i32, %c0_i32_0 : i32, i32
  }
  func.func @transform_1(%arg0: i32) -> (i32, i32) {
    %c0_i32 = arith.constant 0 : i32
    %c0_i32_0 = arith.constant 0 : i32
    %c0_i32_1 = arith.constant 0 : i32
    return %c0_i32, %c0_i32_0 : i32, i32
  }
  func.func @transform_2(%arg0: i32) -> (i32, i32, i32) {
    %c0_i32 = arith.constant 0 : i32
    %c0_i32_0 = arith.constant 0 : i32
    %c0_i32_1 = arith.constant 0 : i32
    return %arg0, %c0_i32, %c0_i32_0 : i32, i32, i32
  }
  func.func @transform_3(%arg0: i32) -> (i32, i32, i32) {
    %c0_i32 = arith.constant 0 : i32
    %c0_i32_0 = arith.constant 0 : i32
    %c0_i32_1 = arith.constant 0 : i32
    return %arg0, %c0_i32, %c0_i32_0 : i32, i32, i32
  }
}

</mosaic_0001>

<llo_original>
// kernel: tpu_custom_call.1
$region0: #{tpu_custom_call.1}
  #allocation0 [shape = 'u32[]', space=smem, size = 0x4, offset = 0x4, fixed_abs, tag = 'smem constant byte address 0x4 - core index']
  #allocation1 [shape = 'u32[144,128]{1,0:T(1,128)}', space=vmem, size = 0x12000, scoped, tag = 'internal scratch']
  %s0 = inlined_call_operand.vmem [shape: f32[8,16], index: 0, kind: input, shape index: {}]
  %s1 = inlined_call_operand.vmem [shape: f32[16,8], index: 1, kind: input, shape index: {}]
  %s2 = inlined_call_operand.hbm [shape: f32[8,16,16], index: 2, kind: input, shape index: {}]
  %s3 = inlined_call_operand.hbm [shape: f32[2,8,32], index: 3, kind: output, shape index: {}]
  %s4 = sld [smem:[#allocation0]]
  $region49: #{tpu_custom_call.1} parent=0
    _
  %s6 = ssub.s32 1, %s4
  %s7 = scalar_select 0, %s6, %s4
  $region1: #{tpu_custom_call.1} parent=0
    #allocation2 [shape = 'u8[65536]{0}', space=vmem, size = 0x10000, scoped, tag = 'input window, operand 2']
    #allocation3 [shape = 's32[2]{0}', space=sflag, size = 0x8, scoped, tag = 'scoped memory for tpu_custom_call.1']
    #allocation4 [shape = 's32[2]{0}', space=sflag, size = 0x8, scoped, tag = 'scoped memory for tpu_custom_call.1']
    #allocation5 [shape = 'u8[8192]{0}', space=vmem, size = 0x2000, scoped, tag = 'output window, operand 0']
    %8 = vsyncpa [#allocation3], 0
    %s9 = scalar_lea.sflag [#allocation3], 1
    %10 = vsyncpa %s9, 0
    %11 = vsyncpa [#allocation4], 0
    %s12 = scalar_lea.sflag [#allocation4], 1
    %13 = vsyncpa %s12, 0
    loop: start=0, step=1, limit=4
    $region2: #{tpu_custom_call.1} parent=1 // loop_pre_header
      _
    $region3: #{tpu_custom_call.1} parent=1 // loop_header
      %s15 = sphi 0, %s19
      %p16 = scmp.ge.s32.totalorder %s15, 4
      %s23 = sphi 0, %s23
      %s25 = sphi 0, %s23
      %s26 = sphi 0, %s25
      %s40 = sphi 0, %s26
      %s44 = sphi 0, %s44
      %s46 = sphi 0, %s44
      %s47 = sphi 0, %s46
      %s61 = sphi 0, %s47
      %s67 = sphi 0, %s69
      %s70 = sphi 0, %s67
      %s71 = sphi 0, %s70
      %s87 = sphi 0, %s71
      %s93 = sphi 0, %s95
      %s96 = sphi 0, %s93
      %s97 = sphi 0, %s96
      %s113 = sphi 0, %s97
    $region4: #{tpu_custom_call.1} parent=1 // loop_header_branch
      %18 = sbr.rel (%p16) target = $region8
    $region5: #{tpu_custom_call.1} parent=1 // loop_body
      %s20 = ssub.s32 %s15, 1
      %s21 = ssub.s32 %s15, 2
      %s22 = sadd.s32 %s15, 1
      %s24 = sadd.s32 %s23, 1
      %p27 = scmp.eq.s32.totalorder %s15, 1
      %p28 = scmp.ne.s32.totalorder %s23, %s25
      %p29 = scmp.eq.s32.totalorder %s15, 0
      %p30 = por %p28, %p29
      %p31 = scmp.ne.s32.totalorder %s23, %s25
      %p32 = scmp.eq.s32.totalorder %s20, 1
      %p33 = por %p31, %p32
      %p34 = scmp.ne.s32.totalorder %s25, %s26
      %p35 = scmp.eq.s32.totalorder %s20, 0
      %p36 = por %p34, %p35
      %p37 = scmp.ne.s32.totalorder %s25, %s26
      %p38 = scmp.eq.s32.totalorder %s21, 1
      %p39 = por %p37, %p38
      %p41 = scmp.ne.s32.totalorder %s26, %s40
      %p42 = scmp.eq.s32.totalorder %s21, 0
      %p43 = por %p41, %p42
      %s45 = sadd.s32 %s44, 1
      %p48 = scmp.eq.s32.totalorder %s15, 1
      %p49 = scmp.ne.s32.totalorder %s44, %s46
      %p50 = scmp.eq.s32.totalorder %s15, 0
      %p51 = por %p49, %p50
      %p52 = scmp.ne.s32.totalorder %s44, %s46
      %p53 = scmp.eq.s32.totalorder %s20, 1
      %p54 = por %p52, %p53
      %p55 = scmp.ne.s32.totalorder %s46, %s47
      %p56 = scmp.eq.s32.totalorder %s20, 0
      %p57 = por %p55, %p56
      %p58 = scmp.ne.s32.totalorder %s46, %s47
      %p59 = scmp.eq.s32.totalorder %s21, 1
      %p60 = por %p58, %p59
      %p62 = scmp.ne.s32.totalorder %s47, %s61
      %p63 = scmp.eq.s32.totalorder %s21, 0
      %p64 = por %p62, %p63
      %s65 = ssub.s32 %s15, %s22
      %p66 = scmp.eq.s32.totalorder %s65, 0
      %s68 = sadd.s32 %s67, 1
      %s69 = scalar_select %p66, %s67, %s68
      %p72 = pneg %p66
      %p73 = scmp.eq.s32.totalorder %s15, 1
      %p74 = por %p72, %p73
      %p75 = scmp.ne.s32.totalorder %s67, %s70
      %p76 = scmp.eq.s32.totalorder %s15, 0
      %p77 = por %p75, %p76
      %p78 = scmp.ne.s32.totalorder %s67, %s70
      %p79 = scmp.eq.s32.totalorder %s20, 1
      %p80 = por %p78, %p79
      %p81 = scmp.ne.s32.totalorder %s70, %s71
      %p82 = scmp.eq.s32.totalorder %s20, 0
      %p83 = por %p81, %p82
      %p84 = scmp.ne.s32.totalorder %s70, %s71
      %p85 = scmp.eq.s32.totalorder %s21, 1
      %p86 = por %p84, %p85
      %p88 = scmp.ne.s32.totalorder %s71, %s87
      %p89 = scmp.eq.s32.totalorder %s21, 0
      %p90 = por %p88, %p89
      %s91 = ssub.s32 %s15, %s22
      %p92 = scmp.eq.s32.totalorder %s91, 0
      %s94 = sadd.s32 %s93, 1
      %s95 = scalar_select %p92, %s93, %s94
      %p98 = pneg %p92
      %p99 = scmp.eq.s32.totalorder %s15, 1
      %p100 = por %p98, %p99
      %p101 = scmp.ne.s32.totalorder %s93, %s96
      %p102 = scmp.eq.s32.totalorder %s15, 0
      %p103 = por %p101, %p102
      %p104 = scmp.ne.s32.totalorder %s93, %s96
      %p105 = scmp.eq.s32.totalorder %s20, 1
      %p106 = por %p104, %p105
      %p107 = scmp.ne.s32.totalorder %s96, %s97
      %p108 = scmp.eq.s32.totalorder %s20, 0
      %p109 = por %p107, %p108
      %p110 = scmp.ne.s32.totalorder %s96, %s97
      %p111 = scmp.eq.s32.totalorder %s21, 1
      %p112 = por %p110, %p111
      %p114 = scmp.ne.s32.totalorder %s97, %s113
      %p115 = scmp.eq.s32.totalorder %s21, 0
      %p116 = por %p114, %p115
      %p117 = scmp.le.s32.totalorder 1, %s15
      %p118 = scmp.lt.s32.totalorder %s15, 3
      %p119 = pnand %p117, %p118
      %p120 = pneg %p119
      // Predicated region
      $region9: #{tpu_custom_call.1} parent=5 // pred_check
        _
      $region10: #{tpu_custom_call.1} parent=5 // pred_check_branch
        %122 = sbr.rel (%p119) target = $region12
      $region11: #{tpu_custom_call.1} parent=5 // pred_region
        %s123 = ssub.s32 %s15, 1
        // Predicated region
        $region13: #{tpu_custom_call.1} parent=11 // pred_check
          %p124 = pneg %p36
        $region14: #{tpu_custom_call.1} parent=11 // pred_check_branch
          %126 = sbr.rel (%p124) target = $region16
        $region15: #{tpu_custom_call.1} parent=11 // pred_region
          _
        $region16: #{tpu_custom_call.1} parent=11 // pred_fallthru
          _
        // Predicated region
        $region17: #{tpu_custom_call.1} parent=11 // pred_check
          %p127 = pneg %p57
        $region18: #{tpu_custom_call.1} parent=11 // pred_check_branch
          %129 = sbr.rel (%p127) target = $region20
        $region19: #{tpu_custom_call.1} parent=11 // pred_region
          _
        $region20: #{tpu_custom_call.1} parent=11 // pred_fallthru
          _
      $region12: #{tpu_custom_call.1} parent=5 // pred_fallthru
        _
      %p130 = scmp.lt.s32.totalorder %s15, 2
      // Predicated region
      $region21: #{tpu_custom_call.1} parent=5 // pred_check
        %p131 = pneg %p130
      $region22: #{tpu_custom_call.1} parent=5 // pred_check_branch
        %133 = sbr.rel (%p131) target = $region24
      $region23: #{tpu_custom_call.1} parent=5 // pred_region
        // Predicated region
        $region25: #{tpu_custom_call.1} parent=23 // pred_check
          %p134 = pneg %p77
        $region26: #{tpu_custom_call.1} parent=23 // pred_check_branch
          %136 = sbr.rel (%p134) target = $region28
        $region27: #{tpu_custom_call.1} parent=23 // pred_region
          %s137 = sand.u32 %s67, 1
          %s138 = scalar_lea.sflag [#allocation3], %s137
          %s139 = sand.u32 %s67, 1
          %s140 = smul.addr %s139, 64
          %s141 = scalar_lea.vmem [#allocation2], %s140
          %s142 = smul.u32 4, %s15
          %s144 = ssub.s32 1024, 1024
          %145 = vsyncadd %s138, %s144
          %s146 = smul.addr %s142, 2
          %s147 = smul.addr %s146, 128
          %s148 = scalar_lea.hbm %s2, %s147
          %s149 = sshll.u32 %s141, 4
          %s150 = int_to_ptr.vmem [resolvable:$true] %s149
          %155 = dma.hbm_to_vmem [thread:$0]  %s148, 1024, %s150, %s138, 128, 128, 8
        $region28: #{tpu_custom_call.1} parent=23 // pred_fallthru
          _
      $region24: #{tpu_custom_call.1} parent=5 // pred_fallthru
        _
      %p156 = scmp.le.s32.totalorder 1, %s15
      %p157 = scmp.lt.s32.totalorder %s15, 3
      %p158 = pnand %p156, %p157
      %p159 = pneg %p158
      // Predicated region
      $region29: #{tpu_custom_call.1} parent=5 // pred_check
        _
      $region30: #{tpu_custom_call.1} parent=5 // pred_check_branch
        %161 = sbr.rel (%p158) target = $region32
      $region31: #{tpu_custom_call.1} parent=5 // pred_region
        %s162 = ssub.s32 %s15, 1
        %s163 = sand.u32 %s70, 1
        %s164 = scalar_lea.sflag [#allocation3], %s163
        %s165 = sand.u32 %s70, 1
        %s166 = smul.addr %s165, 64
        %s167 = scalar_lea.vmem [#allocation2], %s166
        // Predicated region
        $region33: #{tpu_custom_call.1} parent=31 // pred_check
          %p168 = pneg %p83
        $region34: #{tpu_custom_call.1} parent=31 // pred_check_branch
          %170 = sbr.rel (%p168) target = $region36
        $region35: #{tpu_custom_call.1} parent=31 // pred_region
          %171 = dma.done %s164, 1024
        $region36: #{tpu_custom_call.1} parent=31 // pred_fallthru
          _
        %p172 = pneg %p36
        %p173 = pneg %p33
        %p174 = pneg %p57
        %p175 = pneg %p54
        %s176 = sand.u32 %s70, 1
        %s177 = scalar_lea.sflag [#allocation3], %s176
        %s178 = sand.u32 %s70, 1
        %s179 = smul.addr %s178, 64
        %s180 = scalar_lea.vmem [#allocation2], %s179
        %p181 = pneg %p83
        %p182 = pneg %p80
        %p183 = pneg %p109
        %p184 = pneg %p106
        %s185 = sand.u32 %s96, 1
        %s186 = scalar_lea.sflag [#allocation4], %s185
        %s187 = sand.u32 %s96, 1
        %s188 = smul.addr %s187, 8
        %s189 = scalar_lea.vmem [#allocation5], %s188
        %s190 = smul.u32 4, %s20
        %v191 = vld [vmem:[%s167] sm:$0xff]
        %v192 = vld [vmem:[%s167 + $0x8] sm:$0xff]
        %v193 = vld [vmem:[%s167 + $0x10] sm:$0xff]
        %v194 = vld [vmem:[%s167 + $0x18] sm:$0xff]
        %v195 = vld [vmem:[%s167 + $0x20] sm:$0xff]
        %v196 = vld [vmem:[%s167 + $0x28] sm:$0xff]
        %v197 = vld [vmem:[%s167 + $0x30] sm:$0xff]
        %v198 = vld [vmem:[%s167 + $0x38] sm:$0xff]
        %v199 = vld [vmem:[%s1] sm:$0xff]
        %v200 = vld [vmem:[%s1 + $0x8] sm:$0xff]
        %vm201 = vcmask 130048
        %v203 = vsel %vm201, %v191, 0
        %v206 = vsel %vm201, %v192, 0
        %v209 = vsel %vm201, %v193, 0
        %v212 = vsel %vm201, %v194, 0
        %v215 = vsel %vm201, %v195, 0
        %v218 = vsel %vm201, %v196, 0
        %v221 = vsel %vm201, %v197, 0
        %v224 = vsel %vm201, %v198, 0
        %226 = vmatprep.subr.mxu0 0.0
        %227 = vmatpush1.msra.mxu0 0.0
        %228 = vmatprep.subr.mxu0 0.0
        %229 = vmatpush1.msra.mxu0 0.0
        %230 = vmatprep.subr.mxu0 0.0
        %231 = vmatpush1.msra.mxu0 0.0
        %232 = vmatprep.subr.mxu0 0.0
        %233 = vmatpush1.msra.mxu0 0.0
        %234 = vmatprep.subr.mxu0 0.0
        %235 = vmatpush1.msra.mxu0 0.0
        %236 = vmatprep.subr.mxu0 0.0
        %237 = vmatpush1.msra.mxu0 0.0
        %238 = vmatprep.subr.mxu0 0.0
        %239 = vmatpush1.msra.mxu0 0.0
        %240 = vmatprep.subr.mxu0 0.0
        %241 = vmatpush1.msra.mxu0 0.0
        %242 = vmatprep.subr.mxu0 0.0
        %243 = vmatpush1.msra.mxu0 0.0
        %244 = vmatprep.subr.mxu0 0.0
        %245 = vmatpush1.msra.mxu0 0.0
        %246 = vmatprep.subr.mxu0 0.0
        %247 = vmatpush1.msra.mxu0 0.0
        %248 = vmatprep.subr.mxu0 0.0
        %249 = vmatpush1.msra.mxu0 0.0
        %250 = vmatprep.subr.mxu0 0.0
        %251 = vmatpush1.msra.mxu0 0.0
        %252 = vmatprep.subr.mxu0 0.0
        %253 = vmatpush1.msra.mxu0 0.0
        %254 = vmatprep.subr.mxu0 0.0
        %255 = vmatpush1.msra.mxu0 %v200
        %256 = vmatprep.subr.mxu0 0.0
        %257 = vmatpush1.msra.mxu0 %v199
        %258 = vmatprep.subr.mxu0 0.0
        %259 = vmatpush2.msra.mxu0 0.0
        %260 = vmatprep.subr.mxu0 0.0
        %261 = vmatpush2.msra.mxu0 0.0
        %262 = vmatprep.subr.mxu0 0.0
        %263 = vmatpush2.msra.mxu0 0.0
        %264 = vmatprep.subr.mxu0 0.0
        %265 = vmatpush2.msra.mxu0 0.0
        %266 = vmatprep.subr.mxu0 0.0
        %267 = vmatpush2.msra.mxu0 0.0
        %268 = vmatprep.subr.mxu0 0.0
        %269 = vmatpush2.msra.mxu0 0.0
        %270 = vmatprep.subr.mxu0 0.0
        %271 = vmatpush2.msra.mxu0 0.0
        %272 = vmatprep.subr.mxu0 0.0
        %273 = vmatpush2.msra.mxu0 0.0
        %274 = vmatprep.subr.mxu0 0.0
        %275 = vmatpush2.msra.mxu0 0.0
        %276 = vmatprep.subr.mxu0 0.0
        %277 = vmatpush2.msra.mxu0 0.0
        %278 = vmatprep.subr.mxu0 0.0
        %279 = vmatpush2.msra.mxu0 0.0
        %280 = vmatprep.subr.mxu0 0.0
        %281 = vmatpush2.msra.mxu0 0.0
        %282 = vmatprep.subr.mxu0 0.0
        %283 = vmatpush2.msra.mxu0 0.0
        %284 = vmatprep.subr.mxu0 0.0
        %285 = vmatpush2.msra.mxu0 0.0
        %286 = vmatprep.subr.mxu0 0.0
        %287 = vmatpush2.msra.mxu0 0.0
        %288 = vmatprep.subr.mxu0 0.0
        %289 = vmatpush2.msra.mxu0 0.0
        %290 = vmatprep.mubr.f32.mxu0 0.0
        %291 = vmatmul.mubr.f32.gmra.mxu0 %v203
        %v292 = vpop.f32.mrf.mxu0
        %v293 = vadd.f32 0.0, %v292
        %v294 = vpop.f32.mrf.mxu0
        %295 = vmatprep.mubr.f32.mxu0 0.0
        %296 = vmatmul.mubr.f32.gmra.mxu0 %v206
        %v297 = vpop.f32.mrf.mxu0
        %v298 = vadd.f32 0.0, %v297
        %v299 = vpop.f32.mrf.mxu0
        %300 = vmatprep.mubr.f32.mxu0 0.0
        %301 = vmatmul.mubr.f32.gmra.mxu0 %v209
        %v302 = vpop.f32.mrf.mxu0
        %v303 = vadd.f32 0.0, %v302
        %v304 = vpop.f32.mrf.mxu0
        %305 = vmatprep.mubr.f32.mxu0 0.0
        %306 = vmatmul.mubr.f32.gmra.mxu0 %v212
        %v307 = vpop.f32.mrf.mxu0
        %v308 = vadd.f32 0.0, %v307
        %v309 = vpop.f32.mrf.mxu0
        %310 = vmatprep.mubr.f32.mxu0 0.0
        %311 = vmatmul.mubr.f32.gmra.mxu0 %v215
        %v312 = vpop.f32.mrf.mxu0
        %v313 = vadd.f32 0.0, %v312
        %v314 = vpop.f32.mrf.mxu0
        %315 = vmatprep.mubr.f32.mxu0 0.0
        %316 = vmatmul.mubr.f32.gmra.mxu0 %v218
        %v317 = vpop.f32.mrf.mxu0
        %v318 = vadd.f32 0.0, %v317
        %v319 = vpop.f32.mrf.mxu0
        %320 = vmatprep.mubr.f32.mxu0 0.0
        %321 = vmatmul.mubr.f32.gmra.mxu0 %v221
        %v322 = vpop.f32.mrf.mxu0
        %v323 = vadd.f32 0.0, %v322
        %v324 = vpop.f32.mrf.mxu0
        %325 = vmatprep.mubr.f32.mxu0 0.0
        %326 = vmatmul.mubr.f32.gmra.mxu0 %v224
        %v327 = vpop.f32.mrf.mxu0
        %v328 = vadd.f32 0.0, %v327
        %v329 = vpop.f32.mrf.mxu0
        %330 = vdwg.mxu0
        %v331 = vcombine.low %v293, %v313
        %v332 = vcombine.high %v293, %v313
        %v334 = vunpack.c.l.s4 1983009808
        %v335 = vunpack.c.0.s8 %v334
        %v336 = vlaneseq
        %v337 = vshrl.u32 %v336, 7
        %v338 = vsub.s32 %v335, %v337
        %v339 = vrot.slane %v331, %v338
        %v341 = vunpack.c.l.s4 1983009808
        %v342 = vunpack.c.0.s8 %v341
        %v343 = vlaneseq
        %v344 = vshrl.u32 %v343, 7
        %v345 = vsub.s32 %v342, %v344
        %v346 = vrot.slane %v332, %v345
        %v347 = vcombine.low %v303, %v323
        %v348 = vcombine.high %v303, %v323
        %v350 = vunpack.c.l.s4 1983009808
        %v351 = vunpack.c.0.s8 %v350
        %v352 = vlaneseq
        %v353 = vshrl.u32 %v352, 7
        %v354 = vsub.s32 %v351, %v353
        %v355 = vrot.slane %v347, %v354
        %v357 = vunpack.c.l.s4 1983009808
        %v358 = vunpack.c.0.s8 %v357
        %v359 = vlaneseq
        %v360 = vshrl.u32 %v359, 7
        %v361 = vsub.s32 %v358, %v360
        %v362 = vrot.slane %v348, %v361
        %v363 = vcombine.low %v339, %v355
        %v364 = vcombine.high %v339, %v355
        %v366 = vunpack.c.l.s4 1934713408
        %v367 = vunpack.c.0.s8 %v366
        %v368 = vlaneseq
        %v369 = vshrl.u32 %v368, 7
        %v370 = vsub.s32 %v367, %v369
        %v371 = vrot.slane %v363, %v370
        %v373 = vunpack.c.l.s4 1934713408
        %v374 = vunpack.c.0.s8 %v373
        %v375 = vlaneseq
        %v376 = vshrl.u32 %v375, 7
        %v377 = vsub.s32 %v374, %v376
        %v378 = vrot.slane %v364, %v377
        %v379 = vcombine.low %v346, %v362
        %v380 = vcombine.high %v346, %v362
        %v382 = vunpack.c.l.s4 1934713408
        %v383 = vunpack.c.0.s8 %v382
        %v384 = vlaneseq
        %v385 = vshrl.u32 %v384, 7
        %v386 = vsub.s32 %v383, %v385
        %v387 = vrot.slane %v379, %v386
        %v389 = vunpack.c.l.s4 1934713408
        %v390 = vunpack.c.0.s8 %v389
        %v391 = vlaneseq
        %v392 = vshrl.u32 %v391, 7
        %v393 = vsub.s32 %v390, %v392
        %v394 = vrot.slane %v380, %v393
        %v395 = vcombine.high %v371, 0.0
        %v396 = vcombine.high %v378, 0.0
        %v397 = vcombine.high %v387, 0.0
        %v398 = vcombine.high %v394, 0.0
        %v399 = vcombine.low %v298, %v318
        %v400 = vcombine.high %v298, %v318
        %v402 = vunpack.c.l.s4 1983009808
        %v403 = vunpack.c.0.s8 %v402
        %v404 = vlaneseq
        %v405 = vshrl.u32 %v404, 7
        %v406 = vsub.s32 %v403, %v405
        %v407 = vrot.slane %v399, %v406
        %v409 = vunpack.c.l.s4 1983009808
        %v410 = vunpack.c.0.s8 %v409
        %v411 = vlaneseq
        %v412 = vshrl.u32 %v411, 7
        %v413 = vsub.s32 %v410, %v412
        %v414 = vrot.slane %v400, %v413
        %v415 = vcombine.low %v308, %v328
        %v416 = vcombine.high %v308, %v328
        %v418 = vunpack.c.l.s4 1983009808
        %v419 = vunpack.c.0.s8 %v418
        %v420 = vlaneseq
        %v421 = vshrl.u32 %v420, 7
        %v422 = vsub.s32 %v419, %v421
        %v423 = vrot.slane %v415, %v422
        %v425 = vunpack.c.l.s4 1983009808
        %v426 = vunpack.c.0.s8 %v425
        %v427 = vlaneseq
        %v428 = vshrl.u32 %v427, 7
        %v429 = vsub.s32 %v426, %v428
        %v430 = vrot.slane %v416, %v429
        %v431 = vcombine.low %v407, %v423
        %v432 = vcombine.high %v407, %v423
        %v434 = vunpack.c.l.s4 1934713408
        %v435 = vunpack.c.0.s8 %v434
        %v436 = vlaneseq
        %v437 = vshrl.u32 %v436, 7
        %v438 = vsub.s32 %v435, %v437
        %v439 = vrot.slane %v431, %v438
        %v441 = vunpack.c.l.s4 1934713408
        %v442 = vunpack.c.0.s8 %v441
        %v443 = vlaneseq
        %v444 = vshrl.u32 %v443, 7
        %v445 = vsub.s32 %v442, %v444
        %v446 = vrot.slane %v432, %v445
        %v447 = vcombine.low %v414, %v430
        %v448 = vcombine.high %v414, %v430
        %v450 = vunpack.c.l.s4 1934713408
        %v451 = vunpack.c.0.s8 %v450
        %v452 = vlaneseq
        %v453 = vshrl.u32 %v452, 7
        %v454 = vsub.s32 %v451, %v453
        %v455 = vrot.slane %v447, %v454
        %v457 = vunpack.c.l.s4 1934713408
        %v458 = vunpack.c.0.s8 %v457
        %v459 = vlaneseq
        %v460 = vshrl.u32 %v459, 7
        %v461 = vsub.s32 %v458, %v460
        %v462 = vrot.slane %v448, %v461
        %v463 = vcombine.high %v439, 0.0
        %v464 = vcombine.high %v446, 0.0
        %v465 = vcombine.high %v455, 0.0
        %v466 = vcombine.high %v462, 0.0
        %v467 = vcombine.low %v371, %v378
        %v469 = vunpack.c.l.s4 1983009808
        %v470 = vunpack.c.0.s8 %v469
        %v471 = vlaneseq
        %v472 = vshrl.u32 %v471, 7
        %v473 = vsub.s32 %v470, %v472
        %v474 = vrot.slane %v467, %v473
        %v475 = vcombine.low %v395, %v396
        %v477 = vunpack.c.l.s4 1983009808
        %v478 = vunpack.c.0.s8 %v477
        %v479 = vlaneseq
        %v480 = vshrl.u32 %v479, 7
        %v481 = vsub.s32 %v478, %v480
        %v482 = vrot.slane %v475, %v481
        %v483 = vcombine.low %v387, %v394
        %v485 = vunpack.c.l.s4 1983009808
        %v486 = vunpack.c.0.s8 %v485
        %v487 = vlaneseq
        %v488 = vshrl.u32 %v487, 7
        %v489 = vsub.s32 %v486, %v488
        %v490 = vrot.slane %v483, %v489
        %v491 = vcombine.low %v397, %v398
        %v493 = vunpack.c.l.s4 1983009808
        %v494 = vunpack.c.0.s8 %v493
        %v495 = vlaneseq
        %v496 = vshrl.u32 %v495, 7
        %v497 = vsub.s32 %v494, %v496
        %v498 = vrot.slane %v491, %v497
        %v499 = vcombine.low %v474, %v482
        %v500 = vcombine.high %v474, %v482
        %v502 = vunpack.c.l.s4 1934713408
        %v503 = vunpack.c.0.s8 %v502
        %v504 = vlaneseq
        %v505 = vshrl.u32 %v504, 7
        %v506 = vsub.s32 %v503, %v505
        %v507 = vrot.slane %v499, %v506
        %v509 = vunpack.c.l.s4 1934713408
        %v510 = vunpack.c.0.s8 %v509
        %v511 = vlaneseq
        %v512 = vshrl.u32 %v511, 7
        %v513 = vsub.s32 %v510, %v512
        %v514 = vrot.slane %v500, %v513
        %v515 = vcombine.low %v490, %v498
        %v516 = vcombine.high %v490, %v498
        %v518 = vunpack.c.l.s4 1934713408
        %v519 = vunpack.c.0.s8 %v518
        %v520 = vlaneseq
        %v521 = vshrl.u32 %v520, 7
        %v522 = vsub.s32 %v519, %v521
        %v523 = vrot.slane %v515, %v522
        %v525 = vunpack.c.l.s4 1934713408
        %v526 = vunpack.c.0.s8 %v525
        %v527 = vlaneseq
        %v528 = vshrl.u32 %v527, 7
        %v529 = vsub.s32 %v526, %v528
        %v530 = vrot.slane %v516, %v529
        %v531 = vcombine.low %v507, %v523
        %v532 = vcombine.high %v507, %v523
        %v533 = vcombine.low %v514, %v530
        %v534 = vcombine.high %v514, %v530
        %v535 = vcombine.low %v439, %v446
        %v537 = vunpack.c.l.s4 1983009808
        %v538 = vunpack.c.0.s8 %v537
        %v539 = vlaneseq
        %v540 = vshrl.u32 %v539, 7
        %v541 = vsub.s32 %v538, %v540
        %v542 = vrot.slane %v535, %v541
        %v543 = vcombine.low %v463, %v464
        %v545 = vunpack.c.l.s4 1983009808
        %v546 = vunpack.c.0.s8 %v545
        %v547 = vlaneseq
        %v548 = vshrl.u32 %v547, 7
        %v549 = vsub.s32 %v546, %v548
        %v550 = vrot.slane %v543, %v549
        %v551 = vcombine.low %v455, %v462
        %v553 = vunpack.c.l.s4 1983009808
        %v554 = vunpack.c.0.s8 %v553
        %v555 = vlaneseq
        %v556 = vshrl.u32 %v555, 7
        %v557 = vsub.s32 %v554, %v556
        %v558 = vrot.slane %v551, %v557
        %v559 = vcombine.low %v465, %v466
        %v561 = vunpack.c.l.s4 1983009808
        %v562 = vunpack.c.0.s8 %v561
        %v563 = vlaneseq
        %v564 = vshrl.u32 %v563, 7
        %v565 = vsub.s32 %v562, %v564
        %v566 = vrot.slane %v559, %v565
        %v567 = vcombine.low %v542, %v550
        %v568 = vcombine.high %v542, %v550
        %v570 = vunpack.c.l.s4 1934713408
        %v571 = vunpack.c.0.s8 %v570
        %v572 = vlaneseq
        %v573 = vshrl.u32 %v572, 7
        %v574 = vsub.s32 %v571, %v573
        %v575 = vrot.slane %v567, %v574
        %v577 = vunpack.c.l.s4 1934713408
        %v578 = vunpack.c.0.s8 %v577
        %v579 = vlaneseq
        %v580 = vshrl.u32 %v579, 7
        %v581 = vsub.s32 %v578, %v580
        %v582 = vrot.slane %v568, %v581
        %v583 = vcombine.low %v558, %v566
        %v584 = vcombine.high %v558, %v566
        %v586 = vunpack.c.l.s4 1934713408
        %v587 = vunpack.c.0.s8 %v586
        %v588 = vlaneseq
        %v589 = vshrl.u32 %v588, 7
        %v590 = vsub.s32 %v587, %v589
        %v591 = vrot.slane %v583, %v590
        %v593 = vunpack.c.l.s4 1934713408
        %v594 = vunpack.c.0.s8 %v593
        %v595 = vlaneseq
        %v596 = vshrl.u32 %v595, 7
        %v597 = vsub.s32 %v594, %v596
        %v598 = vrot.slane %v584, %v597
        %v599 = vcombine.low %v575, %v591
        %v600 = vcombine.high %v575, %v591
        %v601 = vcombine.low %v582, %v598
        %v602 = vcombine.high %v582, %v598
        %605 = vrot.lane.b32.xlu0 %v532, 8
        %v606 = vpop.permute.xlu0 %605
        %607 = vrot.lane.b32.xlu0 %v600, 8
        %v608 = vpop.permute.xlu0 %607
        %613 = vrot.lane.b32.xlu0 %v533, 16
        %v614 = vpop.permute.xlu0 %613
        %615 = vrot.lane.b32.xlu0 %v601, 16
        %v616 = vpop.permute.xlu0 %615
        %621 = vrot.lane.b32.xlu0 %v534, 24
        %v622 = vpop.permute.xlu0 %621
        %623 = vrot.lane.b32.xlu0 %v602, 24
        %v624 = vpop.permute.xlu0 %623
        %vm627 = vcmask 64512
        %v628 = vsel %vm627, %v531, %v606
        %v629 = vsel %vm627, %v599, %v608
        %v630 = vsel %vm201, %v628, %v614
        %v631 = vsel %vm201, %v629, %v616
        %vm632 = vcmask 195584
        %v633 = vsel %vm632, %v630, %v622
        %v634 = vsel %vm632, %v631, %v624
        %v635 = vld [vmem:[%s0] sm:$0xff]
        %v637 = vsel %vm201, %v635, 0
        %639 = vmatprep.subr.mxu0 0.0
        %640 = vmatpush1.msra.mxu0 0.0
        %641 = vmatprep.subr.mxu0 0.0
        %642 = vmatpush1.msra.mxu0 0.0
        %643 = vmatprep.subr.mxu0 0.0
        %644 = vmatpush1.msra.mxu0 0.0
        %645 = vmatprep.subr.mxu0 0.0
        %646 = vmatpush1.msra.mxu0 0.0
        %647 = vmatprep.subr.mxu0 0.0
        %648 = vmatpush1.msra.mxu0 0.0
        %649 = vmatprep.subr.mxu0 0.0
        %650 = vmatpush1.msra.mxu0 0.0
        %651 = vmatprep.subr.mxu0 0.0
        %652 = vmatpush1.msra.mxu0 0.0
        %653 = vmatprep.subr.mxu0 0.0
        %654 = vmatpush1.msra.mxu0 0.0
        %655 = vmatprep.subr.mxu0 0.0
        %656 = vmatpush1.msra.mxu0 0.0
        %657 = vmatprep.subr.mxu0 0.0
        %658 = vmatpush1.msra.mxu0 0.0
        %659 = vmatprep.subr.mxu0 0.0
        %660 = vmatpush1.msra.mxu0 0.0
        %661 = vmatprep.subr.mxu0 0.0
        %662 = vmatpush1.msra.mxu0 0.0
        %663 = vmatprep.subr.mxu0 0.0
        %664 = vmatpush1.msra.mxu0 0.0
        %665 = vmatprep.subr.mxu0 0.0
        %666 = vmatpush1.msra.mxu0 0.0
        %667 = vmatprep.subr.mxu0 0.0
        %668 = vmatpush1.msra.mxu0 %v634
        %669 = vmatprep.subr.mxu0 0.0
        %670 = vmatpush1.msra.mxu0 %v633
        %671 = vmatprep.subr.mxu0 0.0
        %672 = vmatpush2.msra.mxu0 0.0
        %673 = vmatprep.subr.mxu0 0.0
        %674 = vmatpush2.msra.mxu0 0.0
        %675 = vmatprep.subr.mxu0 0.0
        %676 = vmatpush2.msra.mxu0 0.0
        %677 = vmatprep.subr.mxu0 0.0
        %678 = vmatpush2.msra.mxu0 0.0
        %679 = vmatprep.subr.mxu0 0.0
        %680 = vmatpush2.msra.mxu0 0.0
        %681 = vmatprep.subr.mxu0 0.0
        %682 = vmatpush2.msra.mxu0 0.0
        %683 = vmatprep.subr.mxu0 0.0
        %684 = vmatpush2.msra.mxu0 0.0
        %685 = vmatprep.subr.mxu0 0.0
        %686 = vmatpush2.msra.mxu0 0.0
        %687 = vmatprep.subr.mxu0 0.0
        %688 = vmatpush2.msra.mxu0 0.0
        %689 = vmatprep.subr.mxu0 0.0
        %690 = vmatpush2.msra.mxu0 0.0
        %691 = vmatprep.subr.mxu0 0.0
        %692 = vmatpush2.msra.mxu0 0.0
        %693 = vmatprep.subr.mxu0 0.0
        %694 = vmatpush2.msra.mxu0 0.0
        %695 = vmatprep.subr.mxu0 0.0
        %696 = vmatpush2.msra.mxu0 0.0
        %697 = vmatprep.subr.mxu0 0.0
        %698 = vmatpush2.msra.mxu0 0.0
        %699 = vmatprep.subr.mxu0 0.0
        %700 = vmatpush2.msra.mxu0 0.0
        %701 = vmatprep.subr.mxu0 0.0
        %702 = vmatpush2.msra.mxu0 0.0
        %703 = vmatprep.mubr.f32.mxu0 0.0
        %704 = vmatmul.mubr.f32.gmra.mxu0 %v637
        %v705 = vpop.f32.mrf.mxu0
        %v706 = vadd.f32 0.0, %v705
        %v707 = vpop.f32.mrf.mxu0
        %708 = vdwg.mxu0
        %vm709 = vcmask 261120
        %710 = vst.msk [vmem:[%s189] sm:$0xff] %vm709, %v706
        %s711 = sand.u32 %s96, 1
        %s712 = scalar_lea.sflag [#allocation4], %s711
        %s713 = sand.u32 %s96, 1
        %s714 = smul.addr %s713, 8
        %s715 = scalar_lea.vmem [#allocation5], %s714
        // Predicated region
        $region37: #{tpu_custom_call.1} parent=31 // pred_check
          %p716 = pneg %p106
        $region38: #{tpu_custom_call.1} parent=31 // pred_check_branch
          %718 = sbr.rel (%p716) target = $region40
        $region39: #{tpu_custom_call.1} parent=31 // pred_region
          %s720 = ssub.s32 128, 128
          %721 = vsyncadd %s712, %s720
          %s722 = smul.addr %s20, 128
          %s723 = scalar_lea.hbm %s3, %s722
          %s725 = sshll.u32 %s715, 4
          %s726 = int_to_ptr.vmem [resolvable:$true] %s725
          %728 = dma.vmem_to_hbm [thread:$0]  %s726, 128, %s723, %s712
        $region40: #{tpu_custom_call.1} parent=31 // pred_fallthru
          _
      $region32: #{tpu_custom_call.1} parent=5 // pred_fallthru
        _
      %p729 = scmp.le.s32.totalorder 2, %s15
      // Predicated region
      $region41: #{tpu_custom_call.1} parent=5 // pred_check
        %p730 = pneg %p729
      $region42: #{tpu_custom_call.1} parent=5 // pred_check_branch
        %732 = sbr.rel (%p730) target = $region44
      $region43: #{tpu_custom_call.1} parent=5 // pred_region
        %s733 = ssub.s32 %s15, 2
        // Predicated region
        $region45: #{tpu_custom_call.1} parent=43 // pred_check
          %p734 = pneg %p112
        $region46: #{tpu_custom_call.1} parent=43 // pred_check_branch
          %736 = sbr.rel (%p734) target = $region48
        $region47: #{tpu_custom_call.1} parent=43 // pred_region
          %s737 = sand.u32 %s97, 1
          %s738 = scalar_lea.sflag [#allocation4], %s737
          %s739 = sand.u32 %s97, 1
          %s740 = smul.addr %s739, 8
          %s741 = scalar_lea.vmem [#allocation5], %s740
          %742 = dma.done %s738, 128
        $region48: #{tpu_custom_call.1} parent=43 // pred_fallthru
          _
      $region44: #{tpu_custom_call.1} parent=5 // pred_fallthru
        _
    $region6: #{tpu_custom_call.1} parent=1 // loop_footer
      %s19 = sadd.s32 1, %s15
    $region7: #{tpu_custom_call.1} parent=1 // loop_footer_branch
      %14 = sbr.rel target = $region3
    $region8: #{tpu_custom_call.1} parent=1 // loop_exit
      _
    %743 = vsyncpa [#allocation3], 1
    %s744 = scalar_lea.sflag [#allocation3], 1
    %745 = vsyncpa %s744, 1
    %746 = vsyncpa [#allocation4], 1
    %s747 = scalar_lea.sflag [#allocation4], 1
    %748 = vsyncpa %s747, 1

</llo_original>
